<compile_context>
chip_gen: v7x
topology: tpu7x:2x2x1
jax: 0.10.0
libtpu: 0.0.40
codegen_flags: <defaults>
</compile_context>

<pallas_src>
import functools

import jax
import jax.numpy as jnp
from jax.experimental import pallas as pl
from jax.experimental.pallas import tpu as pltpu


_DIMS = [20, 10, 6, 2, 6, 10, 20]   # hidden sizes of AE_2D ('in-20-10-6-2-6-10-20-out')
_LANE = 128


def _round_up(x, m):
    return (x + m - 1) // m * m


def _default_bf16_act():
    """bf16 tanh/activations only where the VPU/EUP is bf16-capable (v6e/v7x)."""
    try:
        kind = jax.devices()[0].device_kind.lower()
    except Exception:
        return True
    return not any(tag in kind for tag in ("v2", "v3", "v4", "v5"))


def _ae_kernel(x_ref, w1_ref, ws_ref, b_ref, o_ref, *, bf16_act):
    """Whole AE forward for one batch tile; all 8 matmuls + 7 tanh stay in VMEM.

    x_ref : (bt, n_features)            input tile
    w1_ref: (n_features, 128)           first layer weight (true contraction dim)
    ws_ref: (7, 128, 128)               layers 2..8, zero-padded to 128 lanes
    b_ref : (8, 128) f32                all biases, zero-padded
    o_ref : (bt, n_features)            output tile
    """
    n_out = o_ref.shape[-1]
    act_dt = jnp.bfloat16 if bf16_act else jnp.float32
    w_dt = ws_ref.dtype

    def dense(h, w, layer):
        # Cast LHS to the weight dtype (bf16 MXU fast path; no-op for f32 weights),
        # always accumulate in f32; bias add in f32.
        return (jnp.dot(h.astype(w_dt), w, preferred_element_type=jnp.float32)
                + b_ref[layer:layer + 1, :])

    # Layer 1 (en1) + tanh.
    h = jnp.tanh(dense(x_ref[...], w1_ref[...], 0).astype(act_dt))

    # Layers 2..8: tanh after every layer except the final de4.
    # (encode = tanh(en1)->tanh(en2)->tanh(en3)->en4, decode starts with tanh(z).)
    n_stacked = ws_ref.shape[0]          # 7 (static)
    for l in range(n_stacked):
        h = dense(h, ws_ref[l], l + 1)
        if l < n_stacked - 1:
            h = jnp.tanh(h.astype(act_dt))

    # Padded lanes are exactly zero (zero-padded weights/biases keep the math exact).
    o_ref[...] = h[:, :n_out].astype(o_ref.dtype)


def init_params(key, n_features=4):
    """PyTorch nn.Linear default init U(-1/sqrt(fan_in), +1/sqrt(fan_in)).
    Weights stored as (in_features, out_features) so forward is y = x @ W + b."""
    dims = [n_features] + _DIMS + [n_features]
    params = []
    for i in range(len(dims) - 1):
        fan_in, fan_out = dims[i], dims[i + 1]
        key, kw, kb = jax.random.split(key, 3)
        bound = 1.0 / (fan_in ** 0.5)
        w = jax.random.uniform(kw, (fan_in, fan_out), jnp.float32, -bound, bound)
        b = jax.random.uniform(kb, (fan_out,), jnp.float32, -bound, bound)
        params.append((w, b))
    return params


def prepare_params(params, dtype=jnp.bfloat16):
    """One-time packing/padding of weights (hoisted off the forward hot path).

    Returns 3 arrays instead of 16 operands:
      w_first : (n_features, 128)  layer 1 weight, true contraction dim -> x needs no lane pad
      w_stack : (7, 128, 128)      layers 2..8, zero-padded
      biases  : (8, 128) f32       all biases, zero-padded (kept f32 for accuracy; tiny)
    Zero padding keeps the math exact."""
    w0, b0 = params[0]
    n_feat = w0.shape[0]
    n_layers = len(params)

    w_first = jnp.zeros((n_feat, _LANE), dtype).at[:, :w0.shape[1]].set(w0.astype(dtype))
    w_stack = jnp.zeros((n_layers - 1, _LANE, _LANE), dtype)
    biases = jnp.zeros((n_layers, _LANE), jnp.float32).at[0, :b0.shape[0]].set(b0)
    for l, (w, b) in enumerate(params[1:]):
        w_stack = w_stack.at[l, :w.shape[0], :w.shape[1]].set(w.astype(dtype))
        biases = biases.at[l + 1, :b.shape[0]].set(b)
    return (w_first, w_stack, biases)


def ae_2d_forward(x, prepared, *, batch_tile=4096, bf16_act=None):
    """Fused AE_2D forward. `prepared` comes from prepare_params (call once, reuse)."""
    if bf16_act is None:
        bf16_act = _default_bf16_act()
    w_first, w_stack, biases = prepared
    B, n_feat = x.shape

    # Tall batch tiles amortize per-grid-step overhead; clamp to the batch, multiple of 8.
    bt = max(8, min(_round_up(batch_tile, 8), _round_up(B, 8)))
    # Guarantee >=2 grid steps for large batches so ("parallel",) can shard across
    # both v7x TensorCores (harmless on single-TC v5e/v6e).
    if B >= 512 and pl.cdiv(B, bt) < 2:
        bt = max(256, _round_up(pl.cdiv(B, 2), 256))
    grid = (pl.cdiv(B, bt),)   # ragged last tile handled by Pallas block masking

    kernel = functools.partial(_ae_kernel, bf16_act=bf16_act)
    return pl.pallas_call(
        kernel,
        out_shape=jax.ShapeDtypeStruct((B, n_feat), x.dtype),
        grid=grid,
        in_specs=[
            pl.BlockSpec((bt, n_feat), lambda i: (i, 0)),
            pl.BlockSpec(w_first.shape, lambda i: (0, 0)),
            pl.BlockSpec(w_stack.shape, lambda i: (0, 0, 0)),
            pl.BlockSpec(biases.shape, lambda i: (0, 0)),
        ],
        out_specs=pl.BlockSpec((bt, n_feat), lambda i: (i, 0)),
        compiler_params=pltpu.CompilerParams(
            dimension_semantics=("parallel",),
            vmem_limit_bytes=32 * 1024 * 1024,
        ),
    )(x, w_first, w_stack, biases)


def ae_2d_reference(x, params):
    """Pure-JAX reference: tanh after every layer except the final de4."""
    h = x.astype(jnp.float32)
    n = len(params)
    for i, (w, b) in enumerate(params):
        h = jnp.dot(h, w) + b
        if i < n - 1:
            h = jnp.tanh(h)
    return h


if __name__ == "__main__":
    key = jax.random.PRNGKey(0)
    kx, kp = jax.random.split(key)

    n_features = 4
    batch = 64
    x = jax.random.normal(kx, (batch, n_features), jnp.float32)

    params = init_params(kp, n_features=n_features)
    prepared_bf16 = prepare_params(params)                       # default bf16 fast path
    prepared_f32 = prepare_params(params, dtype=jnp.float32)     # exactness path

    # bf16 weights (+ bf16 tanh where supported): the perf path.
    y_bf16 = jax.block_until_ready(ae_2d_forward(x, prepared_bf16))
    # f32 weights + f32 activations: exact path (single grid step).
    y_f32 = jax.block_until_ready(ae_2d_forward(x, prepared_f32, bf16_act=False))
    # Small tile override: exercises the multi-step pipelined grid path.
    y_tiled = jax.block_until_ready(
        ae_2d_forward(x, prepared_f32, batch_tile=16, bf16_act=False))

    y_ref = ae_2d_reference(x, params)
    assert y_bf16.shape == (batch, n_features)
    assert y_f32.shape == (batch, n_features)
    assert jnp.allclose(y_f32, y_ref, atol=1e-5, rtol=1e-5), "mismatch vs reference (f32)"
    assert jnp.allclose(y_tiled, y_ref, atol=1e-5, rtol=1e-5), "mismatch vs reference (tiled)"
    assert jnp.allclose(y_bf16, y_ref, atol=5e-2, rtol=5e-2), "mismatch vs reference (bf16)"

    print("KERNEL_OK")
</pallas_src>

<mosaic_0001>
module attributes {stable_mosaic.version = 11 : i64} {
  func.func @_ae_kernel(%arg0: i32, %arg1: memref<64x4xf32, #tpu.memory_space<vmem>>, %arg2: memref<4x128xbf16, #tpu.memory_space<vmem>>, %arg3: memref<7x128x128xbf16, #tpu.memory_space<vmem>>, %arg4: memref<8x128xf32, #tpu.memory_space<vmem>>, %arg5: memref<64x4xf32, #tpu.memory_space<vmem>>) attributes {dimension_semantics = [#tpu.dimension_semantics<parallel>], iteration_bounds = array<i64: 1>, scalar_prefetch = 0 : i64, scratch_operands = 0 : i64, tpu.core_type = #tpu.core_type<tc>, window_params = [{transform_indices = @transform_0, window_bounds = array<i64: 64, 4>}, {pipeline_mode = #tpu.pipeline_mode<synchronous>, transform_indices = @transform_1, window_bounds = array<i64: 4, 128>}, {pipeline_mode = #tpu.pipeline_mode<synchronous>, transform_indices = @transform_2, window_bounds = array<i64: 7, 128, 128>}, {pipeline_mode = #tpu.pipeline_mode<synchronous>, transform_indices = @transform_3, window_bounds = array<i64: 8, 128>}, {transform_indices = @transform_4, window_bounds = array<i64: 64, 4>}]} {
    %c0 = arith.constant 0 : index
    %c0_0 = arith.constant 0 : index
    %0 = vector.load %arg1[%c0, %c0_0] : memref<64x4xf32, #tpu.memory_space<vmem>>, vector<64x4xf32>
    %c0_1 = arith.constant 0 : index
    %c0_2 = arith.constant 0 : index
    %1 = vector.load %arg2[%c0_1, %c0_2] : memref<4x128xbf16, #tpu.memory_space<vmem>>, vector<4x128xbf16>
    %2 = arith.truncf %0 : vector<64x4xf32> to vector<64x4xbf16>
    %cst = arith.constant dense<0.000000e+00> : vector<64x128xf32>
    %3 = tpu.matmul %2, %1, %cst {dimension_numbers = #tpu.dot_dimension_numbers<[1], [0], [0], [1], [0, 0, 1, 1], [], []>} : vector<64x4xbf16>, vector<4x128xbf16>, vector<64x128xf32> -> vector<64x128xf32>
    %c0_3 = arith.constant 0 : index
    %c0_4 = arith.constant 0 : index
    %4 = vector.load %arg4[%c0_3, %c0_4] : memref<8x128xf32, #tpu.memory_space<vmem>>, vector<1x128xf32>
    %5 = vector.broadcast %4 : vector<1x128xf32> to vector<64x128xf32>
    %6 = arith.addf %3, %5 : vector<64x128xf32>
    %7 = arith.truncf %6 : vector<64x128xf32> to vector<64x128xbf16>
    %8 = math.tanh %7 : vector<64x128xbf16>
    %c0_5 = arith.constant 0 : index
    %c0_6 = arith.constant 0 : index
    %c0_7 = arith.constant 0 : index
    %9 = vector.load %arg3[%c0_5, %c0_6, %c0_7] : memref<7x128x128xbf16, #tpu.memory_space<vmem>>, vector<1x128x128xbf16>
    %10 = vector.shape_cast %9 : vector<1x128x128xbf16> to vector<128x128xbf16>
    %cst_8 = arith.constant dense<0.000000e+00> : vector<64x128xf32>
    %11 = tpu.matmul %8, %10, %cst_8 {dimension_numbers = #tpu.dot_dimension_numbers<[1], [0], [0], [1], [0, 0, 1, 1], [], []>} : vector<64x128xbf16>, vector<128x128xbf16>, vector<64x128xf32> -> vector<64x128xf32>
    %c1 = arith.constant 1 : index
    %c0_9 = arith.constant 0 : index
    %12 = vector.load %arg4[%c1, %c0_9] : memref<8x128xf32, #tpu.memory_space<vmem>>, vector<1x128xf32>
    %13 = vector.broadcast %12 : vector<1x128xf32> to vector<64x128xf32>
    %14 = arith.addf %11, %13 : vector<64x128xf32>
    %15 = arith.truncf %14 : vector<64x128xf32> to vector<64x128xbf16>
    %16 = math.tanh %15 : vector<64x128xbf16>
    %c1_10 = arith.constant 1 : index
    %c0_11 = arith.constant 0 : index
    %c0_12 = arith.constant 0 : index
    %17 = vector.load %arg3[%c1_10, %c0_11, %c0_12] : memref<7x128x128xbf16, #tpu.memory_space<vmem>>, vector<1x128x128xbf16>
    %18 = vector.shape_cast %17 : vector<1x128x128xbf16> to vector<128x128xbf16>
    %cst_13 = arith.constant dense<0.000000e+00> : vector<64x128xf32>
    %19 = tpu.matmul %16, %18, %cst_13 {dimension_numbers = #tpu.dot_dimension_numbers<[1], [0], [0], [1], [0, 0, 1, 1], [], []>} : vector<64x128xbf16>, vector<128x128xbf16>, vector<64x128xf32> -> vector<64x128xf32>
    %c2 = arith.constant 2 : index
    %c0_14 = arith.constant 0 : index
    %20 = vector.load %arg4[%c2, %c0_14] : memref<8x128xf32, #tpu.memory_space<vmem>>, vector<1x128xf32>
    %21 = vector.broadcast %20 : vector<1x128xf32> to vector<64x128xf32>
    %22 = arith.addf %19, %21 : vector<64x128xf32>
    %23 = arith.truncf %22 : vector<64x128xf32> to vector<64x128xbf16>
    %24 = math.tanh %23 : vector<64x128xbf16>
    %c2_15 = arith.constant 2 : index
    %c0_16 = arith.constant 0 : index
    %c0_17 = arith.constant 0 : index
    %25 = vector.load %arg3[%c2_15, %c0_16, %c0_17] : memref<7x128x128xbf16, #tpu.memory_space<vmem>>, vector<1x128x128xbf16>
    %26 = vector.shape_cast %25 : vector<1x128x128xbf16> to vector<128x128xbf16>
    %cst_18 = arith.constant dense<0.000000e+00> : vector<64x128xf32>
    %27 = tpu.matmul %24, %26, %cst_18 {dimension_numbers = #tpu.dot_dimension_numbers<[1], [0], [0], [1], [0, 0, 1, 1], [], []>} : vector<64x128xbf16>, vector<128x128xbf16>, vector<64x128xf32> -> vector<64x128xf32>
    %c3 = arith.constant 3 : index
    %c0_19 = arith.constant 0 : index
    %28 = vector.load %arg4[%c3, %c0_19] : memref<8x128xf32, #tpu.memory_space<vmem>>, vector<1x128xf32>
    %29 = vector.broadcast %28 : vector<1x128xf32> to vector<64x128xf32>
    %30 = arith.addf %27, %29 : vector<64x128xf32>
    %31 = arith.truncf %30 : vector<64x128xf32> to vector<64x128xbf16>
    %32 = math.tanh %31 : vector<64x128xbf16>
    %c3_20 = arith.constant 3 : index
    %c0_21 = arith.constant 0 : index
    %c0_22 = arith.constant 0 : index
    %33 = vector.load %arg3[%c3_20, %c0_21, %c0_22] : memref<7x128x128xbf16, #tpu.memory_space<vmem>>, vector<1x128x128xbf16>
    %34 = vector.shape_cast %33 : vector<1x128x128xbf16> to vector<128x128xbf16>
    %cst_23 = arith.constant dense<0.000000e+00> : vector<64x128xf32>
    %35 = tpu.matmul %32, %34, %cst_23 {dimension_numbers = #tpu.dot_dimension_numbers<[1], [0], [0], [1], [0, 0, 1, 1], [], []>} : vector<64x128xbf16>, vector<128x128xbf16>, vector<64x128xf32> -> vector<64x128xf32>
    %c4 = arith.constant 4 : index
    %c0_24 = arith.constant 0 : index
    %36 = vector.load %arg4[%c4, %c0_24] : memref<8x128xf32, #tpu.memory_space<vmem>>, vector<1x128xf32>
    %37 = vector.broadcast %36 : vector<1x128xf32> to vector<64x128xf32>
    %38 = arith.addf %35, %37 : vector<64x128xf32>
    %39 = arith.truncf %38 : vector<64x128xf32> to vector<64x128xbf16>
    %40 = math.tanh %39 : vector<64x128xbf16>
    %c4_25 = arith.constant 4 : index
    %c0_26 = arith.constant 0 : index
    %c0_27 = arith.constant 0 : index
    %41 = vector.load %arg3[%c4_25, %c0_26, %c0_27] : memref<7x128x128xbf16, #tpu.memory_space<vmem>>, vector<1x128x128xbf16>
    %42 = vector.shape_cast %41 : vector<1x128x128xbf16> to vector<128x128xbf16>
    %cst_28 = arith.constant dense<0.000000e+00> : vector<64x128xf32>
    %43 = tpu.matmul %40, %42, %cst_28 {dimension_numbers = #tpu.dot_dimension_numbers<[1], [0], [0], [1], [0, 0, 1, 1], [], []>} : vector<64x128xbf16>, vector<128x128xbf16>, vector<64x128xf32> -> vector<64x128xf32>
    %c5 = arith.constant 5 : index
    %c0_29 = arith.constant 0 : index
    %44 = vector.load %arg4[%c5, %c0_29] : memref<8x128xf32, #tpu.memory_space<vmem>>, vector<1x128xf32>
    %45 = vector.broadcast %44 : vector<1x128xf32> to vector<64x128xf32>
    %46 = arith.addf %43, %45 : vector<64x128xf32>
    %47 = arith.truncf %46 : vector<64x128xf32> to vector<64x128xbf16>
    %48 = math.tanh %47 : vector<64x128xbf16>
    %c5_30 = arith.constant 5 : index
    %c0_31 = arith.constant 0 : index
    %c0_32 = arith.constant 0 : index
    %49 = vector.load %arg3[%c5_30, %c0_31, %c0_32] : memref<7x128x128xbf16, #tpu.memory_space<vmem>>, vector<1x128x128xbf16>
    %50 = vector.shape_cast %49 : vector<1x128x128xbf16> to vector<128x128xbf16>
    %cst_33 = arith.constant dense<0.000000e+00> : vector<64x128xf32>
    %51 = tpu.matmul %48, %50, %cst_33 {dimension_numbers = #tpu.dot_dimension_numbers<[1], [0], [0], [1], [0, 0, 1, 1], [], []>} : vector<64x128xbf16>, vector<128x128xbf16>, vector<64x128xf32> -> vector<64x128xf32>
    %c6 = arith.constant 6 : index
    %c0_34 = arith.constant 0 : index
    %52 = vector.load %arg4[%c6, %c0_34] : memref<8x128xf32, #tpu.memory_space<vmem>>, vector<1x128xf32>
    %53 = vector.broadcast %52 : vector<1x128xf32> to vector<64x128xf32>
    %54 = arith.addf %51, %53 : vector<64x128xf32>
    %55 = arith.truncf %54 : vector<64x128xf32> to vector<64x128xbf16>
    %56 = math.tanh %55 : vector<64x128xbf16>
    %c6_35 = arith.constant 6 : index
    %c0_36 = arith.constant 0 : index
    %c0_37 = arith.constant 0 : index
    %57 = vector.load %arg3[%c6_35, %c0_36, %c0_37] : memref<7x128x128xbf16, #tpu.memory_space<vmem>>, vector<1x128x128xbf16>
    %58 = vector.shape_cast %57 : vector<1x128x128xbf16> to vector<128x128xbf16>
    %cst_38 = arith.constant dense<0.000000e+00> : vector<64x128xf32>
    %59 = tpu.matmul %56, %58, %cst_38 {dimension_numbers = #tpu.dot_dimension_numbers<[1], [0], [0], [1], [0, 0, 1, 1], [], []>} : vector<64x128xbf16>, vector<128x128xbf16>, vector<64x128xf32> -> vector<64x128xf32>
    %c7 = arith.constant 7 : index
    %c0_39 = arith.constant 0 : index
    %60 = vector.load %arg4[%c7, %c0_39] : memref<8x128xf32, #tpu.memory_space<vmem>>, vector<1x128xf32>
    %61 = vector.broadcast %60 : vector<1x128xf32> to vector<64x128xf32>
    %62 = arith.addf %59, %61 : vector<64x128xf32>
    %63 = vector.extract_strided_slice %62 {offsets = [0, 0], sizes = [64, 4], strides = [1, 1]} : vector<64x128xf32> to vector<64x4xf32>
    %c0_40 = arith.constant 0 : index
    %c0_41 = arith.constant 0 : index
    %64 = vector.load %arg5[%c0_40, %c0_41] : memref<64x4xf32, #tpu.memory_space<vmem>>, vector<64x4xf32>
    tpu.vector_store %arg5[%c0_40, %c0_41], %63 {strides = array<i32>} : memref<64x4xf32, #tpu.memory_space<vmem>>, vector<64x4xf32>,
    return
  }
  func.func @transform_0(%arg0: i32) -> (i32, i32) {
    %c0_i32 = arith.constant 0 : i32
    %c0_i32_0 = arith.constant 0 : i32
    return %arg0, %c0_i32 : i32, i32
  }
  func.func @transform_1(%arg0: i32) -> (i32, i32) {
    %c0_i32 = arith.constant 0 : i32
    %c0_i32_0 = arith.constant 0 : i32
    %c0_i32_1 = arith.constant 0 : i32
    return %c0_i32, %c0_i32_0 : i32, i32
  }
  func.func @transform_2(%arg0: i32) -> (i32, i32, i32) {
    %c0_i32 = arith.constant 0 : i32
    %c0_i32_0 = arith.constant 0 : i32
    %c0_i32_1 = arith.constant 0 : i32
    %c0_i32_2 = arith.constant 0 : i32
    return %c0_i32, %c0_i32_0, %c0_i32_1 : i32, i32, i32
  }
  func.func @transform_3(%arg0: i32) -> (i32, i32) {
    %c0_i32 = arith.constant 0 : i32
    %c0_i32_0 = arith.constant 0 : i32
    %c0_i32_1 = arith.constant 0 : i32
    return %c0_i32, %c0_i32_0 : i32, i32
  }
  func.func @transform_4(%arg0: i32) -> (i32, i32) {
    %c0_i32 = arith.constant 0 : i32
    %c0_i32_0 = arith.constant 0 : i32
    return %arg0, %c0_i32 : i32, i32
  }
}

</mosaic_0001>

<llo_original>
// kernel: tpu_custom_call.1
$region0: #{tpu_custom_call.1}
  #allocation0 [shape = 'u32[]', space=smem, size = 0x4, offset = 0x4, fixed_abs, tag = 'smem constant byte address 0x4 - core index']
  #allocation1 [shape = 'u32[144,128]{1,0:T(1,128)}', space=vmem, size = 0x12000, scoped, tag = 'internal scratch']
  %s0 = inlined_call_operand.vmem [shape: f32[64,4], index: 0, kind: input, shape index: {}]
  %s1 = inlined_call_operand.vmem [shape: bf16[4,128], index: 1, kind: input, shape index: {}]
  %s2 = inlined_call_operand.hbm [shape: bf16[7,128,128], index: 2, kind: input, shape index: {}]
  %s3 = inlined_call_operand.vmem [shape: f32[8,128], index: 3, kind: input, shape index: {}]
  %s4 = inlined_call_operand.vmem [shape: f32[64,4], index: 4, kind: output, shape index: {}]
  %s5 = sld [smem:[#allocation0]]
  $region30: #{tpu_custom_call.1} parent=0
    _
  %s7 = ssub.s32 1, %s5
  %s8 = scalar_select 0, %s7, %s5
  $region1: #{tpu_custom_call.1} parent=0
    #allocation2 [shape = 'u8[229376]{0}', space=vmem, size = 0x38000, scoped, tag = 'input window, operand 2, single buffered']
    #allocation3 [shape = 's32[1]{0}', space=sflag, size = 0x4, scoped, tag = 'scoped memory for tpu_custom_call.1']
    %9 = vsyncpa [#allocation3], 0
    // Predicated region
    $region2: #{tpu_custom_call.1} parent=1 // pred_check
      _
    $region3: #{tpu_custom_call.1} parent=1 // pred_check_branch
      %11 = sbr.rel (0) target = $region5
    $region4: #{tpu_custom_call.1} parent=1 // pred_region
      _
    $region5: #{tpu_custom_call.1} parent=1 // pred_fallthru
      _
    // Predicated region
    $region6: #{tpu_custom_call.1} parent=1 // pred_check
      _
    $region7: #{tpu_custom_call.1} parent=1 // pred_check_branch
      %13 = sbr.rel (0) target = $region9
    $region8: #{tpu_custom_call.1} parent=1 // pred_region
      _
    $region9: #{tpu_custom_call.1} parent=1 // pred_fallthru
      _
    // Predicated region
    $region10: #{tpu_custom_call.1} parent=1 // pred_check
      _
    $region11: #{tpu_custom_call.1} parent=1 // pred_check_branch
      %15 = sbr.rel (0) target = $region13
    $region12: #{tpu_custom_call.1} parent=1 // pred_region
      %s17 = ssub.s32 7168, 7168
      %18 = vsyncadd [#allocation3], %s17
      %s19 = sshll.u32 [#allocation2], 4
      %s20 = int_to_ptr.vmem [resolvable:$true] %s19
      %25 = dma.hbm_to_vmem [thread:$0]  %s2, 7168, %s20, [#allocation3], 64, 64, 4
    $region13: #{tpu_custom_call.1} parent=1 // pred_fallthru
      _
    // Predicated region
    $region14: #{tpu_custom_call.1} parent=1 // pred_check
      _
    $region15: #{tpu_custom_call.1} parent=1 // pred_check_branch
      %27 = sbr.rel (0) target = $region17
    $region16: #{tpu_custom_call.1} parent=1 // pred_region
      _
    $region17: #{tpu_custom_call.1} parent=1 // pred_fallthru
      _
    // Predicated region
    $region18: #{tpu_custom_call.1} parent=1 // pred_check
      _
    $region19: #{tpu_custom_call.1} parent=1 // pred_check_branch
      %29 = sbr.rel (0) target = $region21
    $region20: #{tpu_custom_call.1} parent=1 // pred_region
      %30 = dma.done [#allocation3], 7168
    $region21: #{tpu_custom_call.1} parent=1 // pred_fallthru
      _
    %v32 = vld [vmem:[%s0] sm:$0xff]
    %v33 = vld [vmem:[%s0 + $0x8] sm:$0xff]
    %v34 = vld [vmem:[%s0 + $0x10] sm:$0xff]
    %v35 = vld [vmem:[%s0 + $0x18] sm:$0xff]
    %v36 = vld [vmem:[%s0 + $0x20] sm:$0xff]
    %v37 = vld [vmem:[%s0 + $0x28] sm:$0xff]
    %v38 = vld [vmem:[%s0 + $0x30] sm:$0xff]
    %v39 = vld [vmem:[%s0 + $0x38] sm:$0xff]
    %v40 = vld [vmem:[%s1] sm:$0x3]
    %v41 = vpack.c.bf16 %v33, %v32
    %v42 = vpack.c.bf16 %v35, %v34
    %v43 = vpack.c.bf16 %v37, %v36
    %v44 = vpack.c.bf16 %v39, %v38
    %v45 = vld [vmem:[%s3] sm:$0x1]
    %v46 = vlaneseq
    %v47 = vshrl.u32 %v46, 7
    %v48 = vsub.s32 0, %v47
    %v49 = vrot.slane %v45, %v48
    %vm50 = vcmask 31744
    %v52 = vsel %vm50, %v41, 0
    %v55 = vsel %vm50, %v42, 0
    %v58 = vsel %vm50, %v43, 0
    %v61 = vsel %vm50, %v44, 0
    %vm63 = vcmask 1041408
    %v65 = vsel %vm63, %v40, 0
    %67 = vmatprep.subr.bf16.mxu0 0
    %68 = vmatpush1.bf16.msra.mxu0 %v65
    %69 = vmatprep.subr.bf16.mxu0 0
    %70 = vmatpush1.bf16.msra.mxu0 0
    %71 = vmatprep.subr.bf16.mxu0 0
    %72 = vmatpush1.bf16.msra.mxu0 0
    %73 = vmatprep.subr.bf16.mxu0 0
    %74 = vmatpush1.bf16.msra.mxu0 0
    %75 = vmatprep.subr.bf16.mxu0 0
    %76 = vmatpush1.bf16.msra.mxu0 0
    %77 = vmatprep.subr.bf16.mxu0 0
    %78 = vmatpush1.bf16.msra.mxu0 0
    %79 = vmatprep.subr.bf16.mxu0 0
    %80 = vmatpush1.bf16.msra.mxu0 0
    %81 = vmatprep.subr.bf16.mxu0 0
    %82 = vmatpush1.bf16.msra.mxu0 0
    %83 = vmatprep.subr.bf16.mxu0 0
    %84 = vmatpush1.bf16.msra.mxu0 0
    %85 = vmatprep.subr.bf16.mxu0 0
    %86 = vmatpush1.bf16.msra.mxu0 0
    %87 = vmatprep.subr.bf16.mxu0 0
    %88 = vmatpush1.bf16.msra.mxu0 0
    %89 = vmatprep.subr.bf16.mxu0 0
    %90 = vmatpush1.bf16.msra.mxu0 0
    %91 = vmatprep.subr.bf16.mxu0 0
    %92 = vmatpush1.bf16.msra.mxu0 0
    %93 = vmatprep.subr.bf16.mxu0 0
    %94 = vmatpush1.bf16.msra.mxu0 0
    %95 = vmatprep.subr.bf16.mxu0 0
    %96 = vmatpush1.bf16.msra.mxu0 0
    %97 = vmatprep.subr.bf16.mxu0 0
    %98 = vmatpush1.bf16.msra.mxu0 0
    %99 = vmatprep.mubr.bf16.mxu0 0
    %100 = vmatmul.mubr.bf16.gmra.mrb[0].mxu0 %v52
    %v101 = vpop.f32.mrb[0].mxu0
    %v102 = vadd.f32 %v49, %v101
    %v103 = vpop.f32.mrb[0].mxu0
    %v104 = vpop.f32.mrb[0].mxu0
    %v105 = vadd.f32 %v49, %v104
    %v106 = vpop.f32.mrb[0].mxu0
    %107 = vmatprep.mubr.bf16.mxu0 0
    %108 = vmatmul.mubr.bf16.gmra.mrb[0].mxu0 %v55
    %v109 = vpop.f32.mrb[0].mxu0
    %v110 = vadd.f32 %v49, %v109
    %v111 = vpop.f32.mrb[0].mxu0
    %v112 = vpop.f32.mrb[0].mxu0
    %v113 = vadd.f32 %v49, %v112
    %v114 = vpop.f32.mrb[0].mxu0
    %115 = vmatprep.mubr.bf16.mxu0 0
    %116 = vmatmul.mubr.bf16.gmra.mrb[0].mxu0 %v58
    %v117 = vpop.f32.mrb[0].mxu0
    %v118 = vadd.f32 %v49, %v117
    %v119 = vpop.f32.mrb[0].mxu0
    %v120 = vpop.f32.mrb[0].mxu0
    %v121 = vadd.f32 %v49, %v120
    %v122 = vpop.f32.mrb[0].mxu0
    %123 = vmatprep.mubr.bf16.mxu0 0
    %124 = vmatmul.mubr.bf16.gmra.mrb[0].mxu0 %v61
    %v125 = vpop.f32.mrb[0].mxu0
    %v126 = vadd.f32 %v49, %v125
    %v127 = vpop.f32.mrb[0].mxu0
    %v128 = vpop.f32.mrb[0].mxu0
    %v129 = vadd.f32 %v49, %v128
    %v130 = vpop.f32.mrb[0].mxu0
    %131 = vdwg.mxu0
    %v132 = vpack.c.bf16 %v105, %v102
    %v133 = vpack.c.bf16 %v113, %v110
    %v134 = vpack.c.bf16 %v121, %v118
    %v135 = vpack.c.bf16 %v129, %v126
    %v136 = vtanh.bf16.pop %v132
    %v137 = vtanh.bf16.pop %v133
    %v138 = vtanh.bf16.pop %v134
    %v139 = vtanh.bf16.pop %v135
    %v140 = vld [vmem:[#allocation2] sm:$0xf]
    %v141 = vld [vmem:[#allocation2 + $0x4] sm:$0xf]
    %v142 = vld [vmem:[#allocation2 + $0x8] sm:$0xf]
    %v143 = vld [vmem:[#allocation2 + $0xc] sm:$0xf]
    %v144 = vld [vmem:[#allocation2 + $0x10] sm:$0xf]
    %v145 = vld [vmem:[#allocation2 + $0x14] sm:$0xf]
    %v146 = vld [vmem:[#allocation2 + $0x18] sm:$0xf]
    %v147 = vld [vmem:[#allocation2 + $0x1c] sm:$0xf]
    %v148 = vld [vmem:[#allocation2 + $0x20] sm:$0xf]
    %v149 = vld [vmem:[#allocation2 + $0x24] sm:$0xf]
    %v150 = vld [vmem:[#allocation2 + $0x28] sm:$0xf]
    %v151 = vld [vmem:[#allocation2 + $0x2c] sm:$0xf]
    %v152 = vld [vmem:[#allocation2 + $0x30] sm:$0xf]
    %v153 = vld [vmem:[#allocation2 + $0x34] sm:$0xf]
    %v154 = vld [vmem:[#allocation2 + $0x38] sm:$0xf]
    %v155 = vld [vmem:[#allocation2 + $0x3c] sm:$0xf]
    %v156 = vld [vmem:[%s3 + $0x1] sm:$0x1]
    %v157 = vlaneseq
    %v158 = vshrl.u32 %v157, 7
    %v159 = vsub.s32 0, %v158
    %v160 = vrot.slane %v156, %v159
    %v177 = vunpack.c.l.b16 %v140
    %v178 = vunpack.c.l.b16 %v141
    %v179 = vunpack.c.l.b16 %v142
    %v180 = vunpack.c.l.b16 %v143
    %v181 = vunpack.c.l.b16 %v144
    %v182 = vunpack.c.l.b16 %v145
    %v183 = vunpack.c.l.b16 %v146
    %v184 = vunpack.c.l.b16 %v147
    %v185 = vunpack.c.l.b16 %v148
    %v186 = vunpack.c.l.b16 %v149
    %v187 = vunpack.c.l.b16 %v150
    %v188 = vunpack.c.l.b16 %v151
    %v189 = vunpack.c.l.b16 %v152
    %v190 = vunpack.c.l.b16 %v153
    %v191 = vunpack.c.l.b16 %v154
    %v192 = vunpack.c.l.b16 %v155
    %v193 = vpack.c.b16 %v178, %v177
    %v194 = vpack.c.b16 %v180, %v179
    %v195 = vpack.c.b16 %v182, %v181
    %v196 = vpack.c.b16 %v184, %v183
    %v197 = vpack.c.b16 %v186, %v185
    %v198 = vpack.c.b16 %v188, %v187
    %v199 = vpack.c.b16 %v190, %v189
    %v200 = vpack.c.b16 %v192, %v191
    %209 = vmatprep.subr.bf16.mxu0 0
    %210 = vmatpush1.bf16.msra.mxu0 %v193
    %211 = vmatprep.subr.bf16.mxu0 0
    %212 = vmatpush1.bf16.msra.mxu0 %v194
    %213 = vmatprep.subr.bf16.mxu0 0
    %214 = vmatpush1.bf16.msra.mxu0 %v195
    %215 = vmatprep.subr.bf16.mxu0 0
    %216 = vmatpush1.bf16.msra.mxu0 %v196
    %217 = vmatprep.subr.bf16.mxu0 0
    %218 = vmatpush1.bf16.msra.mxu0 %v197
    %219 = vmatprep.subr.bf16.mxu0 0
    %220 = vmatpush1.bf16.msra.mxu0 %v198
    %221 = vmatprep.subr.bf16.mxu0 0
    %222 = vmatpush1.bf16.msra.mxu0 %v199
    %223 = vmatprep.subr.bf16.mxu0 0
    %224 = vmatpush1.bf16.msra.mxu0 %v200
    %225 = vmatprep.subr.bf16.mxu0 0
    %226 = vmatpush1.bf16.msra.mxu0 0
    %227 = vmatprep.subr.bf16.mxu0 0
    %228 = vmatpush1.bf16.msra.mxu0 0
    %229 = vmatprep.subr.bf16.mxu0 0
    %230 = vmatpush1.bf16.msra.mxu0 0
    %231 = vmatprep.subr.bf16.mxu0 0
    %232 = vmatpush1.bf16.msra.mxu0 0
    %233 = vmatprep.subr.bf16.mxu0 0
    %234 = vmatpush1.bf16.msra.mxu0 0
    %235 = vmatprep.subr.bf16.mxu0 0
    %236 = vmatpush1.bf16.msra.mxu0 0
    %237 = vmatprep.subr.bf16.mxu0 0
    %238 = vmatpush1.bf16.msra.mxu0 0
    %239 = vmatprep.subr.bf16.mxu0 0
    %240 = vmatpush1.bf16.msra.mxu0 0
    %241 = vmatprep.mubr.bf16.mxu0 0
    %242 = vmatmul.mubr.bf16.gmra.mrb[0].mxu0 %v136
    %v243 = vpop.f32.mrb[0].mxu0
    %v244 = vadd.f32 %v160, %v243
    %v245 = vpop.f32.mrb[0].mxu0
    %v246 = vpop.f32.mrb[0].mxu0
    %v247 = vadd.f32 %v160, %v246
    %v248 = vpop.f32.mrb[0].mxu0
    %249 = vmatprep.mubr.bf16.mxu0 0
    %250 = vmatmul.mubr.bf16.gmra.mrb[0].mxu0 %v137
    %v251 = vpop.f32.mrb[0].mxu0
    %v252 = vadd.f32 %v160, %v251
    %v253 = vpop.f32.mrb[0].mxu0
    %v254 = vpop.f32.mrb[0].mxu0
    %v255 = vadd.f32 %v160, %v254
    %v256 = vpop.f32.mrb[0].mxu0
    %257 = vmatprep.mubr.bf16.mxu0 0
    %258 = vmatmul.mubr.bf16.gmra.mrb[0].mxu0 %v138
    %v259 = vpop.f32.mrb[0].mxu0
    %v260 = vadd.f32 %v160, %v259
    %v261 = vpop.f32.mrb[0].mxu0
    %v262 = vpop.f32.mrb[0].mxu0
    %v263 = vadd.f32 %v160, %v262
    %v264 = vpop.f32.mrb[0].mxu0
    %265 = vmatprep.mubr.bf16.mxu0 0
    %266 = vmatmul.mubr.bf16.gmra.mrb[0].mxu0 %v139
    %v267 = vpop.f32.mrb[0].mxu0
    %v268 = vadd.f32 %v160, %v267
    %v269 = vpop.f32.mrb[0].mxu0
    %v270 = vpop.f32.mrb[0].mxu0
    %v271 = vadd.f32 %v160, %v270
    %v272 = vpop.f32.mrb[0].mxu0
    %273 = vdwg.mxu0
    %v274 = vpack.c.bf16 %v247, %v244
    %v275 = vpack.c.bf16 %v255, %v252
    %v276 = vpack.c.bf16 %v263, %v260
    %v277 = vpack.c.bf16 %v271, %v268
    %v278 = vtanh.bf16.pop %v274
    %v279 = vtanh.bf16.pop %v275
    %v280 = vtanh.bf16.pop %v276
    %v281 = vtanh.bf16.pop %v277
    %s282 = scalar_lea.vmem [#allocation2], 64
    %v283 = vld [vmem:[%s282] sm:$0xf]
    %v284 = vld [vmem:[%s282 + $0x4] sm:$0xf]
    %v285 = vld [vmem:[%s282 + $0x8] sm:$0xf]
    %v286 = vld [vmem:[%s282 + $0xc] sm:$0xf]
    %v287 = vld [vmem:[%s282 + $0x10] sm:$0xf]
    %v288 = vld [vmem:[%s282 + $0x14] sm:$0xf]
    %v289 = vld [vmem:[%s282 + $0x18] sm:$0xf]
    %v290 = vld [vmem:[%s282 + $0x1c] sm:$0xf]
    %v291 = vld [vmem:[%s282 + $0x20] sm:$0xf]
    %v292 = vld [vmem:[%s282 + $0x24] sm:$0xf]
    %v293 = vld [vmem:[%s282 + $0x28] sm:$0xf]
    %v294 = vld [vmem:[%s282 + $0x2c] sm:$0xf]
    %v295 = vld [vmem:[%s282 + $0x30] sm:$0xf]
    %v296 = vld [vmem:[%s282 + $0x34] sm:$0xf]
    %v297 = vld [vmem:[%s282 + $0x38] sm:$0xf]
    %v298 = vld [vmem:[%s282 + $0x3c] sm:$0xf]
    %v299 = vld [vmem:[%s3 + $0x2] sm:$0x1]
    %v300 = vlaneseq
    %v301 = vshrl.u32 %v300, 7
    %v302 = vsub.s32 0, %v301
    %v303 = vrot.slane %v299, %v302
    %v320 = vunpack.c.l.b16 %v283
    %v321 = vunpack.c.l.b16 %v284
    %v322 = vunpack.c.l.b16 %v285
    %v323 = vunpack.c.l.b16 %v286
    %v324 = vunpack.c.l.b16 %v287
    %v325 = vunpack.c.l.b16 %v288
    %v326 = vunpack.c.l.b16 %v289
    %v327 = vunpack.c.l.b16 %v290
    %v328 = vunpack.c.l.b16 %v291
    %v329 = vunpack.c.l.b16 %v292
    %v330 = vunpack.c.l.b16 %v293
    %v331 = vunpack.c.l.b16 %v294
    %v332 = vunpack.c.l.b16 %v295
    %v333 = vunpack.c.l.b16 %v296
    %v334 = vunpack.c.l.b16 %v297
    %v335 = vunpack.c.l.b16 %v298
    %v336 = vpack.c.b16 %v321, %v320
    %v337 = vpack.c.b16 %v323, %v322
    %v338 = vpack.c.b16 %v325, %v324
    %v339 = vpack.c.b16 %v327, %v326
    %v340 = vpack.c.b16 %v329, %v328
    %v341 = vpack.c.b16 %v331, %v330
    %v342 = vpack.c.b16 %v333, %v332
    %v343 = vpack.c.b16 %v335, %v334
    %352 = vmatprep.subr.bf16.mxu0 0
    %353 = vmatpush1.bf16.msra.mxu0 %v336
    %354 = vmatprep.subr.bf16.mxu0 0
    %355 = vmatpush1.bf16.msra.mxu0 %v337
    %356 = vmatprep.subr.bf16.mxu0 0
    %357 = vmatpush1.bf16.msra.mxu0 %v338
    %358 = vmatprep.subr.bf16.mxu0 0
    %359 = vmatpush1.bf16.msra.mxu0 %v339
    %360 = vmatprep.subr.bf16.mxu0 0
    %361 = vmatpush1.bf16.msra.mxu0 %v340
    %362 = vmatprep.subr.bf16.mxu0 0
    %363 = vmatpush1.bf16.msra.mxu0 %v341
    %364 = vmatprep.subr.bf16.mxu0 0
    %365 = vmatpush1.bf16.msra.mxu0 %v342
    %366 = vmatprep.subr.bf16.mxu0 0
    %367 = vmatpush1.bf16.msra.mxu0 %v343
    %368 = vmatprep.subr.bf16.mxu0 0
    %369 = vmatpush1.bf16.msra.mxu0 0
    %370 = vmatprep.subr.bf16.mxu0 0
    %371 = vmatpush1.bf16.msra.mxu0 0
    %372 = vmatprep.subr.bf16.mxu0 0
    %373 = vmatpush1.bf16.msra.mxu0 0
    %374 = vmatprep.subr.bf16.mxu0 0
    %375 = vmatpush1.bf16.msra.mxu0 0
    %376 = vmatprep.subr.bf16.mxu0 0
    %377 = vmatpush1.bf16.msra.mxu0 0
    %378 = vmatprep.subr.bf16.mxu0 0
    %379 = vmatpush1.bf16.msra.mxu0 0
    %380 = vmatprep.subr.bf16.mxu0 0
    %381 = vmatpush1.bf16.msra.mxu0 0
    %382 = vmatprep.subr.bf16.mxu0 0
    %383 = vmatpush1.bf16.msra.mxu0 0
    %384 = vmatprep.mubr.bf16.mxu0 0
    %385 = vmatmul.mubr.bf16.gmra.mrb[0].mxu0 %v278
    %v386 = vpop.f32.mrb[0].mxu0
    %v387 = vadd.f32 %v303, %v386
    %v388 = vpop.f32.mrb[0].mxu0
    %v389 = vpop.f32.mrb[0].mxu0
    %v390 = vadd.f32 %v303, %v389
    %v391 = vpop.f32.mrb[0].mxu0
    %392 = vmatprep.mubr.bf16.mxu0 0
    %393 = vmatmul.mubr.bf16.gmra.mrb[0].mxu0 %v279
    %v394 = vpop.f32.mrb[0].mxu0
    %v395 = vadd.f32 %v303, %v394
    %v396 = vpop.f32.mrb[0].mxu0
    %v397 = vpop.f32.mrb[0].mxu0
    %v398 = vadd.f32 %v303, %v397
    %v399 = vpop.f32.mrb[0].mxu0
    %400 = vmatprep.mubr.bf16.mxu0 0
    %401 = vmatmul.mubr.bf16.gmra.mrb[0].mxu0 %v280
    %v402 = vpop.f32.mrb[0].mxu0
    %v403 = vadd.f32 %v303, %v402
    %v404 = vpop.f32.mrb[0].mxu0
    %v405 = vpop.f32.mrb[0].mxu0
    %v406 = vadd.f32 %v303, %v405
    %v407 = vpop.f32.mrb[0].mxu0
    %408 = vmatprep.mubr.bf16.mxu0 0
    %409 = vmatmul.mubr.bf16.gmra.mrb[0].mxu0 %v281
    %v410 = vpop.f32.mrb[0].mxu0
    %v411 = vadd.f32 %v303, %v410
    %v412 = vpop.f32.mrb[0].mxu0
    %v413 = vpop.f32.mrb[0].mxu0
    %v414 = vadd.f32 %v303, %v413
    %v415 = vpop.f32.mrb[0].mxu0
    %416 = vdwg.mxu0
    %v417 = vpack.c.bf16 %v390, %v387
    %v418 = vpack.c.bf16 %v398, %v395
    %v419 = vpack.c.bf16 %v406, %v403
    %v420 = vpack.c.bf16 %v414, %v411
    %v421 = vtanh.bf16.pop %v417
    %v422 = vtanh.bf16.pop %v418
    %v423 = vtanh.bf16.pop %v419
    %v424 = vtanh.bf16.pop %v420
    %s425 = scalar_lea.vmem [#allocation2], 128
    %v426 = vld [vmem:[%s425] sm:$0xf]
    %v427 = vld [vmem:[%s425 + $0x4] sm:$0xf]
    %v428 = vld [vmem:[%s425 + $0x8] sm:$0xf]
    %v429 = vld [vmem:[%s425 + $0xc] sm:$0xf]
    %v430 = vld [vmem:[%s425 + $0x10] sm:$0xf]
    %v431 = vld [vmem:[%s425 + $0x14] sm:$0xf]
    %v432 = vld [vmem:[%s425 + $0x18] sm:$0xf]
    %v433 = vld [vmem:[%s425 + $0x1c] sm:$0xf]
    %v434 = vld [vmem:[%s425 + $0x20] sm:$0xf]
    %v435 = vld [vmem:[%s425 + $0x24] sm:$0xf]
    %v436 = vld [vmem:[%s425 + $0x28] sm:$0xf]
    %v437 = vld [vmem:[%s425 + $0x2c] sm:$0xf]
    %v438 = vld [vmem:[%s425 + $0x30] sm:$0xf]
    %v439 = vld [vmem:[%s425 + $0x34] sm:$0xf]
    %v440 = vld [vmem:[%s425 + $0x38] sm:$0xf]
    %v441 = vld [vmem:[%s425 + $0x3c] sm:$0xf]
    %v442 = vld [vmem:[%s3 + $0x3] sm:$0x1]
    %v443 = vlaneseq
    %v444 = vshrl.u32 %v443, 7
    %v445 = vsub.s32 0, %v444
    %v446 = vrot.slane %v442, %v445
    %v463 = vunpack.c.l.b16 %v426
    %v464 = vunpack.c.l.b16 %v427
    %v465 = vunpack.c.l.b16 %v428
    %v466 = vunpack.c.l.b16 %v429
    %v467 = vunpack.c.l.b16 %v430
    %v468 = vunpack.c.l.b16 %v431
    %v469 = vunpack.c.l.b16 %v432
    %v470 = vunpack.c.l.b16 %v433
    %v471 = vunpack.c.l.b16 %v434
    %v472 = vunpack.c.l.b16 %v435
    %v473 = vunpack.c.l.b16 %v436
    %v474 = vunpack.c.l.b16 %v437
    %v475 = vunpack.c.l.b16 %v438
    %v476 = vunpack.c.l.b16 %v439
    %v477 = vunpack.c.l.b16 %v440
    %v478 = vunpack.c.l.b16 %v441
    %v479 = vpack.c.b16 %v464, %v463
    %v480 = vpack.c.b16 %v466, %v465
    %v481 = vpack.c.b16 %v468, %v467
    %v482 = vpack.c.b16 %v470, %v469
    %v483 = vpack.c.b16 %v472, %v471
    %v484 = vpack.c.b16 %v474, %v473
    %v485 = vpack.c.b16 %v476, %v475
    %v486 = vpack.c.b16 %v478, %v477
    %495 = vmatprep.subr.bf16.mxu0 0
    %496 = vmatpush1.bf16.msra.mxu0 %v479
    %497 = vmatprep.subr.bf16.mxu0 0
    %498 = vmatpush1.bf16.msra.mxu0 %v480
    %499 = vmatprep.subr.bf16.mxu0 0
    %500 = vmatpush1.bf16.msra.mxu0 %v481
    %501 = vmatprep.subr.bf16.mxu0 0
    %502 = vmatpush1.bf16.msra.mxu0 %v482
    %503 = vmatprep.subr.bf16.mxu0 0
    %504 = vmatpush1.bf16.msra.mxu0 %v483
    %505 = vmatprep.subr.bf16.mxu0 0
    %506 = vmatpush1.bf16.msra.mxu0 %v484
    %507 = vmatprep.subr.bf16.mxu0 0
    %508 = vmatpush1.bf16.msra.mxu0 %v485
    %509 = vmatprep.subr.bf16.mxu0 0
    %510 = vmatpush1.bf16.msra.mxu0 %v486
    %511 = vmatprep.subr.bf16.mxu0 0
    %512 = vmatpush1.bf16.msra.mxu0 0
    %513 = vmatprep.subr.bf16.mxu0 0
    %514 = vmatpush1.bf16.msra.mxu0 0
    %515 = vmatprep.subr.bf16.mxu0 0
    %516 = vmatpush1.bf16.msra.mxu0 0
    %517 = vmatprep.subr.bf16.mxu0 0
    %518 = vmatpush1.bf16.msra.mxu0 0
    %519 = vmatprep.subr.bf16.mxu0 0
    %520 = vmatpush1.bf16.msra.mxu0 0
    %521 = vmatprep.subr.bf16.mxu0 0
    %522 = vmatpush1.bf16.msra.mxu0 0
    %523 = vmatprep.subr.bf16.mxu0 0
    %524 = vmatpush1.bf16.msra.mxu0 0
    %525 = vmatprep.subr.bf16.mxu0 0
    %526 = vmatpush1.bf16.msra.mxu0 0
    %527 = vmatprep.mubr.bf16.mxu0 0
    %528 = vmatmul.mubr.bf16.gmra.mrb[0].mxu0 %v421
    %v529 = vpop.f32.mrb[0].mxu0
    %v530 = vadd.f32 %v446, %v529
    %v531 = vpop.f32.mrb[0].mxu0
    %v532 = vpop.f32.mrb[0].mxu0
    %v533 = vadd.f32 %v446, %v532
    %v534 = vpop.f32.mrb[0].mxu0
    %535 = vmatprep.mubr.bf16.mxu0 0
    %536 = vmatmul.mubr.bf16.gmra.mrb[0].mxu0 %v422
    %v537 = vpop.f32.mrb[0].mxu0
    %v538 = vadd.f32 %v446, %v537
    %v539 = vpop.f32.mrb[0].mxu0
    %v540 = vpop.f32.mrb[0].mxu0
    %v541 = vadd.f32 %v446, %v540
    %v542 = vpop.f32.mrb[0].mxu0
    %543 = vmatprep.mubr.bf16.mxu0 0
    %544 = vmatmul.mubr.bf16.gmra.mrb[0].mxu0 %v423
    %v545 = vpop.f32.mrb[0].mxu0
    %v546 = vadd.f32 %v446, %v545
    %v547 = vpop.f32.mrb[0].mxu0
    %v548 = vpop.f32.mrb[0].mxu0
    %v549 = vadd.f32 %v446, %v548
    %v550 = vpop.f32.mrb[0].mxu0
    %551 = vmatprep.mubr.bf16.mxu0 0
    %552 = vmatmul.mubr.bf16.gmra.mrb[0].mxu0 %v424
    %v553 = vpop.f32.mrb[0].mxu0
    %v554 = vadd.f32 %v446, %v553
    %v555 = vpop.f32.mrb[0].mxu0
    %v556 = vpop.f32.mrb[0].mxu0
    %v557 = vadd.f32 %v446, %v556
    %v558 = vpop.f32.mrb[0].mxu0
    %559 = vdwg.mxu0
    %v560 = vpack.c.bf16 %v533, %v530
    %v561 = vpack.c.bf16 %v541, %v538
    %v562 = vpack.c.bf16 %v549, %v546
    %v563 = vpack.c.bf16 %v557, %v554
    %v564 = vtanh.bf16.pop %v560
    %v565 = vtanh.bf16.pop %v561
    %v566 = vtanh.bf16.pop %v562
    %v567 = vtanh.bf16.pop %v563
    %s568 = scalar_lea.vmem [#allocation2], 192
    %v569 = vld [vmem:[%s568] sm:$0xf]
    %v570 = vld [vmem:[%s568 + $0x4] sm:$0xf]
    %v571 = vld [vmem:[%s568 + $0x8] sm:$0xf]
    %v572 = vld [vmem:[%s568 + $0xc] sm:$0xf]
    %v573 = vld [vmem:[%s568 + $0x10] sm:$0xf]
    %v574 = vld [vmem:[%s568 + $0x14] sm:$0xf]
    %v575 = vld [vmem:[%s568 + $0x18] sm:$0xf]
    %v576 = vld [vmem:[%s568 + $0x1c] sm:$0xf]
    %v577 = vld [vmem:[%s568 + $0x20] sm:$0xf]
    %v578 = vld [vmem:[%s568 + $0x24] sm:$0xf]
    %v579 = vld [vmem:[%s568 + $0x28] sm:$0xf]
    %v580 = vld [vmem:[%s568 + $0x2c] sm:$0xf]
    %v581 = vld [vmem:[%s568 + $0x30] sm:$0xf]
    %v582 = vld [vmem:[%s568 + $0x34] sm:$0xf]
    %v583 = vld [vmem:[%s568 + $0x38] sm:$0xf]
    %v584 = vld [vmem:[%s568 + $0x3c] sm:$0xf]
    %v585 = vld [vmem:[%s3 + $0x4] sm:$0x1]
    %v586 = vlaneseq
    %v587 = vshrl.u32 %v586, 7
    %v588 = vsub.s32 0, %v587
    %v589 = vrot.slane %v585, %v588
    %v606 = vunpack.c.l.b16 %v569
    %v607 = vunpack.c.l.b16 %v570
    %v608 = vunpack.c.l.b16 %v571
    %v609 = vunpack.c.l.b16 %v572
    %v610 = vunpack.c.l.b16 %v573
    %v611 = vunpack.c.l.b16 %v574
    %v612 = vunpack.c.l.b16 %v575
    %v613 = vunpack.c.l.b16 %v576
    %v614 = vunpack.c.l.b16 %v577
    %v615 = vunpack.c.l.b16 %v578
    %v616 = vunpack.c.l.b16 %v579
    %v617 = vunpack.c.l.b16 %v580
    %v618 = vunpack.c.l.b16 %v581
    %v619 = vunpack.c.l.b16 %v582
    %v620 = vunpack.c.l.b16 %v583
    %v621 = vunpack.c.l.b16 %v584
    %v622 = vpack.c.b16 %v607, %v606
    %v623 = vpack.c.b16 %v609, %v608
    %v624 = vpack.c.b16 %v611, %v610
    %v625 = vpack.c.b16 %v613, %v612
    %v626 = vpack.c.b16 %v615, %v614
    %v627 = vpack.c.b16 %v617, %v616
    %v628 = vpack.c.b16 %v619, %v618
    %v629 = vpack.c.b16 %v621, %v620
    %638 = vmatprep.subr.bf16.mxu0 0
    %639 = vmatpush1.bf16.msra.mxu0 %v622
    %640 = vmatprep.subr.bf16.mxu0 0
    %641 = vmatpush1.bf16.msra.mxu0 %v623
    %642 = vmatprep.subr.bf16.mxu0 0
    %643 = vmatpush1.bf16.msra.mxu0 %v624
    %644 = vmatprep.subr.bf16.mxu0 0
    %645 = vmatpush1.bf16.msra.mxu0 %v625
    %646 = vmatprep.subr.bf16.mxu0 0
    %647 = vmatpush1.bf16.msra.mxu0 %v626
    %648 = vmatprep.subr.bf16.mxu0 0
    %649 = vmatpush1.bf16.msra.mxu0 %v627
    %650 = vmatprep.subr.bf16.mxu0 0
    %651 = vmatpush1.bf16.msra.mxu0 %v628
    %652 = vmatprep.subr.bf16.mxu0 0
    %653 = vmatpush1.bf16.msra.mxu0 %v629
    %654 = vmatprep.subr.bf16.mxu0 0
    %655 = vmatpush1.bf16.msra.mxu0 0
    %656 = vmatprep.subr.bf16.mxu0 0
    %657 = vmatpush1.bf16.msra.mxu0 0
    %658 = vmatprep.subr.bf16.mxu0 0
    %659 = vmatpush1.bf16.msra.mxu0 0
    %660 = vmatprep.subr.bf16.mxu0 0
    %661 = vmatpush1.bf16.msra.mxu0 0
    %662 = vmatprep.subr.bf16.mxu0 0
    %663 = vmatpush1.bf16.msra.mxu0 0
    %664 = vmatprep.subr.bf16.mxu0 0
    %665 = vmatpush1.bf16.msra.mxu0 0
    %666 = vmatprep.subr.bf16.mxu0 0
    %667 = vmatpush1.bf16.msra.mxu0 0
    %668 = vmatprep.subr.bf16.mxu0 0
    %669 = vmatpush1.bf16.msra.mxu0 0
    %670 = vmatprep.mubr.bf16.mxu0 0
    %671 = vmatmul.mubr.bf16.gmra.mrb[0].mxu0 %v564
    %v672 = vpop.f32.mrb[0].mxu0
    %v673 = vadd.f32 %v589, %v672
    %v674 = vpop.f32.mrb[0].mxu0
    %v675 = vpop.f32.mrb[0].mxu0
    %v676 = vadd.f32 %v589, %v675
    %v677 = vpop.f32.mrb[0].mxu0
    %678 = vmatprep.mubr.bf16.mxu0 0
    %679 = vmatmul.mubr.bf16.gmra.mrb[0].mxu0 %v565
    %v680 = vpop.f32.mrb[0].mxu0
    %v681 = vadd.f32 %v589, %v680
    %v682 = vpop.f32.mrb[0].mxu0
    %v683 = vpop.f32.mrb[0].mxu0
    %v684 = vadd.f32 %v589, %v683
    %v685 = vpop.f32.mrb[0].mxu0
    %686 = vmatprep.mubr.bf16.mxu0 0
    %687 = vmatmul.mubr.bf16.gmra.mrb[0].mxu0 %v566
    %v688 = vpop.f32.mrb[0].mxu0
    %v689 = vadd.f32 %v589, %v688
    %v690 = vpop.f32.mrb[0].mxu0
    %v691 = vpop.f32.mrb[0].mxu0
    %v692 = vadd.f32 %v589, %v691
    %v693 = vpop.f32.mrb[0].mxu0
    %694 = vmatprep.mubr.bf16.mxu0 0
    %695 = vmatmul.mubr.bf16.gmra.mrb[0].mxu0 %v567
    %v696 = vpop.f32.mrb[0].mxu0
    %v697 = vadd.f32 %v589, %v696
    %v698 = vpop.f32.mrb[0].mxu0
    %v699 = vpop.f32.mrb[0].mxu0
    %v700 = vadd.f32 %v589, %v699
    %v701 = vpop.f32.mrb[0].mxu0
    %702 = vdwg.mxu0
    %v703 = vpack.c.bf16 %v676, %v673
    %v704 = vpack.c.bf16 %v684, %v681
    %v705 = vpack.c.bf16 %v692, %v689
    %v706 = vpack.c.bf16 %v700, %v697
    %v707 = vtanh.bf16.pop %v703
    %v708 = vtanh.bf16.pop %v704
    %v709 = vtanh.bf16.pop %v705
    %v710 = vtanh.bf16.pop %v706
    %s711 = scalar_lea.vmem [#allocation2], 256
    %v712 = vld [vmem:[%s711] sm:$0xf]
    %v713 = vld [vmem:[%s711 + $0x4] sm:$0xf]
    %v714 = vld [vmem:[%s711 + $0x8] sm:$0xf]
    %v715 = vld [vmem:[%s711 + $0xc] sm:$0xf]
    %v716 = vld [vmem:[%s711 + $0x10] sm:$0xf]
    %v717 = vld [vmem:[%s711 + $0x14] sm:$0xf]
    %v718 = vld [vmem:[%s711 + $0x18] sm:$0xf]
    %v719 = vld [vmem:[%s711 + $0x1c] sm:$0xf]
    %v720 = vld [vmem:[%s711 + $0x20] sm:$0xf]
    %v721 = vld [vmem:[%s711 + $0x24] sm:$0xf]
    %v722 = vld [vmem:[%s711 + $0x28] sm:$0xf]
    %v723 = vld [vmem:[%s711 + $0x2c] sm:$0xf]
    %v724 = vld [vmem:[%s711 + $0x30] sm:$0xf]
    %v725 = vld [vmem:[%s711 + $0x34] sm:$0xf]
    %v726 = vld [vmem:[%s711 + $0x38] sm:$0xf]
    %v727 = vld [vmem:[%s711 + $0x3c] sm:$0xf]
    %v728 = vld [vmem:[%s3 + $0x5] sm:$0x1]
    %v729 = vlaneseq
    %v730 = vshrl.u32 %v729, 7
    %v731 = vsub.s32 0, %v730
    %v732 = vrot.slane %v728, %v731
    %v749 = vunpack.c.l.b16 %v712
    %v750 = vunpack.c.l.b16 %v713
    %v751 = vunpack.c.l.b16 %v714
    %v752 = vunpack.c.l.b16 %v715
    %v753 = vunpack.c.l.b16 %v716
    %v754 = vunpack.c.l.b16 %v717
    %v755 = vunpack.c.l.b16 %v718
    %v756 = vunpack.c.l.b16 %v719
    %v757 = vunpack.c.l.b16 %v720
    %v758 = vunpack.c.l.b16 %v721
    %v759 = vunpack.c.l.b16 %v722
    %v760 = vunpack.c.l.b16 %v723
    %v761 = vunpack.c.l.b16 %v724
    %v762 = vunpack.c.l.b16 %v725
    %v763 = vunpack.c.l.b16 %v726
    %v764 = vunpack.c.l.b16 %v727
    %v765 = vpack.c.b16 %v750, %v749
    %v766 = vpack.c.b16 %v752, %v751
    %v767 = vpack.c.b16 %v754, %v753
    %v768 = vpack.c.b16 %v756, %v755
    %v769 = vpack.c.b16 %v758, %v757
    %v770 = vpack.c.b16 %v760, %v759
    %v771 = vpack.c.b16 %v762, %v761
    %v772 = vpack.c.b16 %v764, %v763
    %781 = vmatprep.subr.bf16.mxu0 0
    %782 = vmatpush1.bf16.msra.mxu0 %v765
    %783 = vmatprep.subr.bf16.mxu0 0
    %784 = vmatpush1.bf16.msra.mxu0 %v766
    %785 = vmatprep.subr.bf16.mxu0 0
    %786 = vmatpush1.bf16.msra.mxu0 %v767
    %787 = vmatprep.subr.bf16.mxu0 0
    %788 = vmatpush1.bf16.msra.mxu0 %v768
    %789 = vmatprep.subr.bf16.mxu0 0
    %790 = vmatpush1.bf16.msra.mxu0 %v769
    %791 = vmatprep.subr.bf16.mxu0 0
    %792 = vmatpush1.bf16.msra.mxu0 %v770
    %793 = vmatprep.subr.bf16.mxu0 0
    %794 = vmatpush1.bf16.msra.mxu0 %v771
    %795 = vmatprep.subr.bf16.mxu0 0
    %796 = vmatpush1.bf16.msra.mxu0 %v772
    %797 = vmatprep.subr.bf16.mxu0 0
    %798 = vmatpush1.bf16.msra.mxu0 0
    %799 = vmatprep.subr.bf16.mxu0 0
    %800 = vmatpush1.bf16.msra.mxu0 0
    %801 = vmatprep.subr.bf16.mxu0 0
    %802 = vmatpush1.bf16.msra.mxu0 0
    %803 = vmatprep.subr.bf16.mxu0 0
    %804 = vmatpush1.bf16.msra.mxu0 0
    %805 = vmatprep.subr.bf16.mxu0 0
    %806 = vmatpush1.bf16.msra.mxu0 0
    %807 = vmatprep.subr.bf16.mxu0 0
    %808 = vmatpush1.bf16.msra.mxu0 0
    %809 = vmatprep.subr.bf16.mxu0 0
    %810 = vmatpush1.bf16.msra.mxu0 0
    %811 = vmatprep.subr.bf16.mxu0 0
    %812 = vmatpush1.bf16.msra.mxu0 0
    %813 = vmatprep.mubr.bf16.mxu0 0
    %814 = vmatmul.mubr.bf16.gmra.mrb[0].mxu0 %v707
    %v815 = vpop.f32.mrb[0].mxu0
    %v816 = vadd.f32 %v732, %v815
    %v817 = vpop.f32.mrb[0].mxu0
    %v818 = vpop.f32.mrb[0].mxu0
    %v819 = vadd.f32 %v732, %v818
    %v820 = vpop.f32.mrb[0].mxu0
    %821 = vmatprep.mubr.bf16.mxu0 0
    %822 = vmatmul.mubr.bf16.gmra.mrb[0].mxu0 %v708
    %v823 = vpop.f32.mrb[0].mxu0
    %v824 = vadd.f32 %v732, %v823
    %v825 = vpop.f32.mrb[0].mxu0
    %v826 = vpop.f32.mrb[0].mxu0
    %v827 = vadd.f32 %v732, %v826
    %v828 = vpop.f32.mrb[0].mxu0
    %829 = vmatprep.mubr.bf16.mxu0 0
    %830 = vmatmul.mubr.bf16.gmra.mrb[0].mxu0 %v709
    %v831 = vpop.f32.mrb[0].mxu0
    %v832 = vadd.f32 %v732, %v831
    %v833 = vpop.f32.mrb[0].mxu0
    %v834 = vpop.f32.mrb[0].mxu0
    %v835 = vadd.f32 %v732, %v834
    %v836 = vpop.f32.mrb[0].mxu0
    %837 = vmatprep.mubr.bf16.mxu0 0
    %838 = vmatmul.mubr.bf16.gmra.mrb[0].mxu0 %v710
    %v839 = vpop.f32.mrb[0].mxu0
    %v840 = vadd.f32 %v732, %v839
    %v841 = vpop.f32.mrb[0].mxu0
    %v842 = vpop.f32.mrb[0].mxu0
    %v843 = vadd.f32 %v732, %v842
    %v844 = vpop.f32.mrb[0].mxu0
    %845 = vdwg.mxu0
    %v846 = vpack.c.bf16 %v819, %v816
    %v847 = vpack.c.bf16 %v827, %v824
    %v848 = vpack.c.bf16 %v835, %v832
    %v849 = vpack.c.bf16 %v843, %v840
    %v850 = vtanh.bf16.pop %v846
    %v851 = vtanh.bf16.pop %v847
    %v852 = vtanh.bf16.pop %v848
    %v853 = vtanh.bf16.pop %v849
    %s854 = scalar_lea.vmem [#allocation2], 320
    %v855 = vld [vmem:[%s854] sm:$0xf]
    %v856 = vld [vmem:[%s854 + $0x4] sm:$0xf]
    %v857 = vld [vmem:[%s854 + $0x8] sm:$0xf]
    %v858 = vld [vmem:[%s854 + $0xc] sm:$0xf]
    %v859 = vld [vmem:[%s854 + $0x10] sm:$0xf]
    %v860 = vld [vmem:[%s854 + $0x14] sm:$0xf]
    %v861 = vld [vmem:[%s854 + $0x18] sm:$0xf]
    %v862 = vld [vmem:[%s854 + $0x1c] sm:$0xf]
    %v863 = vld [vmem:[%s854 + $0x20] sm:$0xf]
    %v864 = vld [vmem:[%s854 + $0x24] sm:$0xf]
    %v865 = vld [vmem:[%s854 + $0x28] sm:$0xf]
    %v866 = vld [vmem:[%s854 + $0x2c] sm:$0xf]
    %v867 = vld [vmem:[%s854 + $0x30] sm:$0xf]
    %v868 = vld [vmem:[%s854 + $0x34] sm:$0xf]
    %v869 = vld [vmem:[%s854 + $0x38] sm:$0xf]
    %v870 = vld [vmem:[%s854 + $0x3c] sm:$0xf]
    %v871 = vld [vmem:[%s3 + $0x6] sm:$0x1]
    %v872 = vlaneseq
    %v873 = vshrl.u32 %v872, 7
    %v874 = vsub.s32 0, %v873
    %v875 = vrot.slane %v871, %v874
    %v892 = vunpack.c.l.b16 %v855
    %v893 = vunpack.c.l.b16 %v856
    %v894 = vunpack.c.l.b16 %v857
    %v895 = vunpack.c.l.b16 %v858
    %v896 = vunpack.c.l.b16 %v859
    %v897 = vunpack.c.l.b16 %v860
    %v898 = vunpack.c.l.b16 %v861
    %v899 = vunpack.c.l.b16 %v862
    %v900 = vunpack.c.l.b16 %v863
    %v901 = vunpack.c.l.b16 %v864
    %v902 = vunpack.c.l.b16 %v865
    %v903 = vunpack.c.l.b16 %v866
    %v904 = vunpack.c.l.b16 %v867
    %v905 = vunpack.c.l.b16 %v868
    %v906 = vunpack.c.l.b16 %v869
    %v907 = vunpack.c.l.b16 %v870
    %v908 = vpack.c.b16 %v893, %v892
    %v909 = vpack.c.b16 %v895, %v894
    %v910 = vpack.c.b16 %v897, %v896
    %v911 = vpack.c.b16 %v899, %v898
    %v912 = vpack.c.b16 %v901, %v900
    %v913 = vpack.c.b16 %v903, %v902
    %v914 = vpack.c.b16 %v905, %v904
    %v915 = vpack.c.b16 %v907, %v906
    %924 = vmatprep.subr.bf16.mxu0 0
    %925 = vmatpush1.bf16.msra.mxu0 %v908
    %926 = vmatprep.subr.bf16.mxu0 0
    %927 = vmatpush1.bf16.msra.mxu0 %v909
    %928 = vmatprep.subr.bf16.mxu0 0
    %929 = vmatpush1.bf16.msra.mxu0 %v910
    %930 = vmatprep.subr.bf16.mxu0 0
    %931 = vmatpush1.bf16.msra.mxu0 %v911
    %932 = vmatprep.subr.bf16.mxu0 0
    %933 = vmatpush1.bf16.msra.mxu0 %v912
    %934 = vmatprep.subr.bf16.mxu0 0
    %935 = vmatpush1.bf16.msra.mxu0 %v913
    %936 = vmatprep.subr.bf16.mxu0 0
    %937 = vmatpush1.bf16.msra.mxu0 %v914
    %938 = vmatprep.subr.bf16.mxu0 0
    %939 = vmatpush1.bf16.msra.mxu0 %v915
    %940 = vmatprep.subr.bf16.mxu0 0
    %941 = vmatpush1.bf16.msra.mxu0 0
    %942 = vmatprep.subr.bf16.mxu0 0
    %943 = vmatpush1.bf16.msra.mxu0 0
    %944 = vmatprep.subr.bf16.mxu0 0
    %945 = vmatpush1.bf16.msra.mxu0 0
    %946 = vmatprep.subr.bf16.mxu0 0
    %947 = vmatpush1.bf16.msra.mxu0 0
    %948 = vmatprep.subr.bf16.mxu0 0
    %949 = vmatpush1.bf16.msra.mxu0 0
    %950 = vmatprep.subr.bf16.mxu0 0
    %951 = vmatpush1.bf16.msra.mxu0 0
    %952 = vmatprep.subr.bf16.mxu0 0
    %953 = vmatpush1.bf16.msra.mxu0 0
    %954 = vmatprep.subr.bf16.mxu0 0
    %955 = vmatpush1.bf16.msra.mxu0 0
    %956 = vmatprep.mubr.bf16.mxu0 0
    %957 = vmatmul.mubr.bf16.gmra.mrb[0].mxu0 %v850
    %v958 = vpop.f32.mrb[0].mxu0
    %v959 = vadd.f32 %v875, %v958
    %v960 = vpop.f32.mrb[0].mxu0
    %v961 = vpop.f32.mrb[0].mxu0
    %v962 = vadd.f32 %v875, %v961
    %v963 = vpop.f32.mrb[0].mxu0
    %964 = vmatprep.mubr.bf16.mxu0 0
    %965 = vmatmul.mubr.bf16.gmra.mrb[0].mxu0 %v851
    %v966 = vpop.f32.mrb[0].mxu0
    %v967 = vadd.f32 %v875, %v966
    %v968 = vpop.f32.mrb[0].mxu0
    %v969 = vpop.f32.mrb[0].mxu0
    %v970 = vadd.f32 %v875, %v969
    %v971 = vpop.f32.mrb[0].mxu0
    %972 = vmatprep.mubr.bf16.mxu0 0
    %973 = vmatmul.mubr.bf16.gmra.mrb[0].mxu0 %v852
    %v974 = vpop.f32.mrb[0].mxu0
    %v975 = vadd.f32 %v875, %v974
    %v976 = vpop.f32.mrb[0].mxu0
    %v977 = vpop.f32.mrb[0].mxu0
    %v978 = vadd.f32 %v875, %v977
    %v979 = vpop.f32.mrb[0].mxu0
    %980 = vmatprep.mubr.bf16.mxu0 0
    %981 = vmatmul.mubr.bf16.gmra.mrb[0].mxu0 %v853
    %v982 = vpop.f32.mrb[0].mxu0
    %v983 = vadd.f32 %v875, %v982
    %v984 = vpop.f32.mrb[0].mxu0
    %v985 = vpop.f32.mrb[0].mxu0
    %v986 = vadd.f32 %v875, %v985
    %v987 = vpop.f32.mrb[0].mxu0
    %988 = vdwg.mxu0
    %v989 = vpack.c.bf16 %v962, %v959
    %v990 = vpack.c.bf16 %v970, %v967
    %v991 = vpack.c.bf16 %v978, %v975
    %v992 = vpack.c.bf16 %v986, %v983
    %v993 = vtanh.bf16.pop %v989
    %v994 = vtanh.bf16.pop %v990
    %v995 = vtanh.bf16.pop %v991
    %v996 = vtanh.bf16.pop %v992
    %s997 = scalar_lea.vmem [#allocation2], 384
    %v998 = vld [vmem:[%s997] sm:$0xf]
    %v999 = vld [vmem:[%s997 + $0x4] sm:$0xf]
    %v1000 = vld [vmem:[%s997 + $0x8] sm:$0xf]
    %v1001 = vld [vmem:[%s997 + $0xc] sm:$0xf]
    %v1002 = vld [vmem:[%s997 + $0x10] sm:$0xf]
    %v1003 = vld [vmem:[%s997 + $0x14] sm:$0xf]
    %v1004 = vld [vmem:[%s997 + $0x18] sm:$0xf]
    %v1005 = vld [vmem:[%s997 + $0x1c] sm:$0xf]
    %v1006 = vld [vmem:[%s997 + $0x20] sm:$0xf]
    %v1007 = vld [vmem:[%s997 + $0x24] sm:$0xf]
    %v1008 = vld [vmem:[%s997 + $0x28] sm:$0xf]
    %v1009 = vld [vmem:[%s997 + $0x2c] sm:$0xf]
    %v1010 = vld [vmem:[%s997 + $0x30] sm:$0xf]
    %v1011 = vld [vmem:[%s997 + $0x34] sm:$0xf]
    %v1012 = vld [vmem:[%s997 + $0x38] sm:$0xf]
    %v1013 = vld [vmem:[%s997 + $0x3c] sm:$0xf]
    %v1014 = vld [vmem:[%s3 + $0x7] sm:$0x1]
    %v1015 = vlaneseq
    %v1016 = vshrl.u32 %v1015, 7
    %v1017 = vsub.s32 0, %v1016
    %v1018 = vrot.slane %v1014, %v1017
    %v1035 = vunpack.c.l.b16 %v998
    %v1036 = vunpack.c.l.b16 %v999
    %v1037 = vunpack.c.l.b16 %v1000
    %v1038 = vunpack.c.l.b16 %v1001
    %v1039 = vunpack.c.l.b16 %v1002
    %v1040 = vunpack.c.l.b16 %v1003
    %v1041 = vunpack.c.l.b16 %v1004
    %v1042 = vunpack.c.l.b16 %v1005
    %v1043 = vunpack.c.l.b16 %v1006
    %v1044 = vunpack.c.l.b16 %v1007
    %v1045 = vunpack.c.l.b16 %v1008
    %v1046 = vunpack.c.l.b16 %v1009
    %v1047 = vunpack.c.l.b16 %v1010
    %v1048 = vunpack.c.l.b16 %v1011
    %v1049 = vunpack.c.l.b16 %v1012
    %v1050 = vunpack.c.l.b16 %v1013
    %v1051 = vpack.c.b16 %v1036, %v1035
    %v1052 = vpack.c.b16 %v1038, %v1037
    %v1053 = vpack.c.b16 %v1040, %v1039
    %v1054 = vpack.c.b16 %v1042, %v1041
    %v1055 = vpack.c.b16 %v1044, %v1043
    %v1056 = vpack.c.b16 %v1046, %v1045
    %v1057 = vpack.c.b16 %v1048, %v1047
    %v1058 = vpack.c.b16 %v1050, %v1049
    %1067 = vmatprep.subr.bf16.mxu0 0
    %1068 = vmatpush1.bf16.msra.mxu0 %v1051
    %1069 = vmatprep.subr.bf16.mxu0 0
    %1070 = vmatpush1.bf16.msra.mxu0 %v1052
    %1071 = vmatprep.subr.bf16.mxu0 0
    %1072 = vmatpush1.bf16.msra.mxu0 %v1053
    %1073 = vmatprep.subr.bf16.mxu0 0
    %1074 = vmatpush1.bf16.msra.mxu0 %v1054
    %1075 = vmatprep.subr.bf16.mxu0 0
    %1076 = vmatpush1.bf16.msra.mxu0 %v1055
    %1077 = vmatprep.subr.bf16.mxu0 0
    %1078 = vmatpush1.bf16.msra.mxu0 %v1056
    %1079 = vmatprep.subr.bf16.mxu0 0
    %1080 = vmatpush1.bf16.msra.mxu0 %v1057
    %1081 = vmatprep.subr.bf16.mxu0 0
    %1082 = vmatpush1.bf16.msra.mxu0 %v1058
    %1083 = vmatprep.subr.bf16.mxu0 0
    %1084 = vmatpush1.bf16.msra.mxu0 0
    %1085 = vmatprep.subr.bf16.mxu0 0
    %1086 = vmatpush1.bf16.msra.mxu0 0
    %1087 = vmatprep.subr.bf16.mxu0 0
    %1088 = vmatpush1.bf16.msra.mxu0 0
    %1089 = vmatprep.subr.bf16.mxu0 0
    %1090 = vmatpush1.bf16.msra.mxu0 0
    %1091 = vmatprep.subr.bf16.mxu0 0
    %1092 = vmatpush1.bf16.msra.mxu0 0
    %1093 = vmatprep.subr.bf16.mxu0 0
    %1094 = vmatpush1.bf16.msra.mxu0 0
    %1095 = vmatprep.subr.bf16.mxu0 0
    %1096 = vmatpush1.bf16.msra.mxu0 0
    %1097 = vmatprep.subr.bf16.mxu0 0
    %1098 = vmatpush1.bf16.msra.mxu0 0
    %1099 = vmatprep.mubr.bf16.mxu0 0
    %1100 = vmatmul.mubr.bf16.gmra.mrb[0].mxu0 %v993
    %v1101 = vpop.f32.mrb[0].mxu0
    %v1102 = vadd.f32 %v1018, %v1101
    %v1103 = vpop.f32.mrb[0].mxu0
    %v1104 = vpop.f32.mrb[0].mxu0
    %v1105 = vadd.f32 %v1018, %v1104
    %v1106 = vpop.f32.mrb[0].mxu0
    %1107 = vmatprep.mubr.bf16.mxu0 0
    %1108 = vmatmul.mubr.bf16.gmra.mrb[0].mxu0 %v994
    %v1109 = vpop.f32.mrb[0].mxu0
    %v1110 = vadd.f32 %v1018, %v1109
    %v1111 = vpop.f32.mrb[0].mxu0
    %v1112 = vpop.f32.mrb[0].mxu0
    %v1113 = vadd.f32 %v1018, %v1112
    %v1114 = vpop.f32.mrb[0].mxu0
    %1115 = vmatprep.mubr.bf16.mxu0 0
    %1116 = vmatmul.mubr.bf16.gmra.mrb[0].mxu0 %v995
    %v1117 = vpop.f32.mrb[0].mxu0
    %v1118 = vadd.f32 %v1018, %v1117
    %v1119 = vpop.f32.mrb[0].mxu0
    %v1120 = vpop.f32.mrb[0].mxu0
    %v1121 = vadd.f32 %v1018, %v1120
    %v1122 = vpop.f32.mrb[0].mxu0
    %1123 = vmatprep.mubr.bf16.mxu0 0
    %1124 = vmatmul.mubr.bf16.gmra.mrb[0].mxu0 %v996
    %v1125 = vpop.f32.mrb[0].mxu0
    %v1126 = vadd.f32 %v1018, %v1125
    %v1127 = vpop.f32.mrb[0].mxu0
    %v1128 = vpop.f32.mrb[0].mxu0
    %v1129 = vadd.f32 %v1018, %v1128
    %v1130 = vpop.f32.mrb[0].mxu0
    %1131 = vdwg.mxu0
    %1132 = vst.msk [vmem:[%s4] sm:$0xff] %vm50, %v1102
    %1133 = vst.msk [vmem:[%s4 + $0x8] sm:$0xff] %vm50, %v1105
    %1134 = vst.msk [vmem:[%s4 + $0x10] sm:$0xff] %vm50, %v1110
    %1135 = vst.msk [vmem:[%s4 + $0x18] sm:$0xff] %vm50, %v1113
    %1136 = vst.msk [vmem:[%s4 + $0x20] sm:$0xff] %vm50, %v1118
    %1137 = vst.msk [vmem:[%s4 + $0x28] sm:$0xff] %vm50, %v1121
    %1138 = vst.msk [vmem:[%s4 + $0x30] sm:$0xff] %vm50, %v1126
    %1139 = vst.msk [vmem:[%s4 + $0x38] sm:$0xff] %vm50, %v1129
    // Predicated region
    $region22: #{tpu_custom_call.1} parent=1 // pred_check
      _
    $region23: #{tpu_custom_call.1} parent=1 // pred_check_branch
      %1141 = sbr.rel (0) target = $region25
    $region24: #{tpu_custom_call.1} parent=1 // pred_region
      _
    $region25: #{tpu_custom_call.1} parent=1 // pred_fallthru
      _
    // Predicated region
    $region26: #{tpu_custom_call.1} parent=1 // pred_check
      _
    $region27: #{tpu_custom_call.1} parent=1 // pred_check_branch
      %1143 = sbr.rel (0) target = $region29
    $region28: #{tpu_custom_call.1} parent=1 // pred_region
      _
    $region29: #{tpu_custom_call.1} parent=1 // pred_fallthru
      _
    %1144 = vsyncpa [#allocation3], 1

</llo_original>
